<compile_context>
chip_gen: v5e
topology: v5e:2x2
jax: 0.10.0
libtpu: 0.0.40
codegen_flags: <defaults>
</compile_context>

<pallas_src>
import functools

import jax
import jax.numpy as jnp
from jax.experimental import pallas as pl
from jax.experimental.pallas import tpu as pltpu


def _sine_act_kernel(x_ref, w_ref, o_ref, *, C, sin_dtype):
    # x_ref: (tm, F+1)    rows of the flattened (B*T, F) input + ones column
    # w_ref: (F+1, F*C)   block-diagonal weight with the bias as the last row
    # o_ref: (tm, F*C)
    z = jnp.dot(x_ref[...], w_ref[...], preferred_element_type=jnp.float32)
    fc = z.shape[-1]
    # sin on every channel except the last channel of each per-feature group.
    ch = jax.lax.broadcasted_iota(jnp.int32, (1, fc), 1)
    is_sin = (ch % C) < (C - 1)
    z = z.astype(sin_dtype)
    o_ref[...] = jnp.where(is_sin, jnp.sin(z), z).astype(o_ref.dtype)


def _round_up(n, m):
    return ((n + m - 1) // m) * m


def _tensorcores_per_chip():
    """Best-effort TensorCore count (2 on v7x, 1 on v5e/v6e); defaults to 1."""
    try:
        info = pltpu.get_tpu_info()
        for name in ("num_cores", "core_count", "num_tensorcores",
                     "tensorcore_count", "num_cores_per_chip"):
            v = getattr(info, name, None)
            if isinstance(v, int) and v > 0:
                return v
    except Exception:
        pass
    try:
        v = getattr(jax.devices()[0], "num_cores", None)
        if isinstance(v, int) and v > 0:
            return v
    except Exception:
        pass
    return 1


def sine_activation(x, w, b, *, tm=2048, out_dtype=None, low_precision_sin=False):
    """x: (B, T, F) float32; w: (C, 1) Linear(1, C) weight; b: (C,) bias.

    Returns (B, T, F*C); out[..., i*C + j] = sin/id(x[..., i] * w[j] + b[j]).
    `out_dtype=jnp.bfloat16` halves HBM store traffic (compute stays f32).
    `low_precision_sin=True` additionally runs the sin/select in bf16 when the
    output is bf16 (use only on v6e/v7x; v5e has no bf16 VALU).
    """
    B, T, F = x.shape
    C = w.shape[0]
    FC = F * C
    M = B * T
    out_dtype = x.dtype if out_dtype is None else jnp.dtype(out_dtype)
    Kp = F + 1  # extra ones column so the bias rides on the MXU

    # ---- row-tile selection (lane/sublane-padding aware VMEM estimate) ----
    vmem_budget = 8 * 1024 * 1024
    out_elt = jnp.dtype(out_dtype).itemsize
    in_row_bytes = _round_up(Kp, 128) * 4            # (tm, F+1) lane-padded
    out_row_bytes = _round_up(FC, 128) * out_elt     # (tm, FC) output tile
    bytes_per_row = 2 * (in_row_bytes + out_row_bytes)          # double-buffered
    const_bytes = 2 * _round_up(Kp, 8) * _round_up(FC, 128) * 4  # resident weight
    tm_cap = max(8, (vmem_budget - const_bytes) // bytes_per_row)
    tm_eff = max(8, (min(tm, tm_cap) // 8) * 8)
    tm_eff = min(tm_eff, _round_up(M, 8))           # never wider than the problem

    # Aim for >=2 grid steps per TensorCore (megacore sharding + pipelining),
    # but never shrink the tile below 512 rows (per-step overhead dominates).
    target_steps = 2 * _tensorcores_per_chip()
    while pl.cdiv(M, tm_eff) < target_steps and tm_eff > 512:
        tm_eff = max(512, _round_up(tm_eff // 2, 8))

    # ---- constant operands (plain-JAX glue) ------------------------------
    # Block-diagonal weight: out[:, i*C + j] = x[:, i] * w[j]; last row = bias.
    w_vec = w.reshape(C).astype(jnp.float32)
    eye = jnp.eye(F, dtype=jnp.float32)
    w_blk = (eye[:, :, None] * w_vec[None, None, :]).reshape(F, FC)
    b_row = jnp.tile(b.astype(jnp.float32), (F,)).reshape(1, FC)
    w_big = jnp.concatenate([w_blk, b_row], axis=0)              # (F+1, FC)

    x2 = x.reshape(M, F).astype(jnp.float32)
    x2 = jnp.concatenate([x2, jnp.ones((M, 1), jnp.float32)], axis=-1)  # (M, F+1)

    sin_dtype = (jnp.bfloat16
                 if (low_precision_sin and out_dtype == jnp.bfloat16)
                 else jnp.float32)
    kernel = functools.partial(_sine_act_kernel, C=C, sin_dtype=sin_dtype)

    # Note: when FC % 128 != 0 the output block (= full last dim) falls back to
    # masked partial stores; FC is a multiple of 128 in the intended configs.
    out = pl.pallas_call(
        kernel,
        out_shape=jax.ShapeDtypeStruct((M, FC), out_dtype),
        grid_spec=pltpu.PrefetchScalarGridSpec(
            num_scalar_prefetch=0,
            grid=(pl.cdiv(M, tm_eff),),
            in_specs=[
                pl.BlockSpec((tm_eff, Kp), lambda i: (i, 0)),
                pl.BlockSpec((Kp, FC), lambda i: (0, 0)),
            ],
            out_specs=pl.BlockSpec((tm_eff, FC), lambda i: (i, 0)),
        ),
        compiler_params=pltpu.CompilerParams(
            dimension_semantics=("parallel",),
        ),
    )(x2, w_big)

    return out.reshape(B, T, FC)


if __name__ == "__main__":
    key = jax.random.PRNGKey(0)
    kx, kw, kb = jax.random.split(key, 3)

    # channels = (F, C): Linear(1, C) -> C output channels per feature
    B, T, F, C = 2, 8, 4, 32

    x = jax.random.normal(kx, (B, T, F), dtype=jnp.float32)
    # nn.Linear(1, C) parameter shapes: weight (C, 1), bias (C,)
    w = jax.random.uniform(kw, (C, 1), dtype=jnp.float32, minval=-1.0, maxval=1.0)
    b = jax.random.uniform(kb, (C,), dtype=jnp.float32, minval=-1.0, maxval=1.0)

    # f32 output path (matches PyTorch reference)
    out = sine_activation(x, w, b)
    jax.block_until_ready(out)

    # Pure-JAX reference of the PyTorch forward (loop over features, concat last dim)
    f = x[..., None] * w.reshape(C)[None, None, None, :] + b[None, None, None, :]
    f = jnp.concatenate([jnp.sin(f[..., :-1]), f[..., -1:]], axis=-1)
    ref = f.reshape(B, T, F * C)
    assert out.shape == (B, T, F * C)
    assert jnp.allclose(out, ref, atol=1e-5, rtol=1e-5), "mismatch vs reference (f32)"

    # bf16-output path (halves HBM write traffic; compute stays f32)
    out_bf16 = sine_activation(x, w, b, out_dtype=jnp.bfloat16)
    jax.block_until_ready(out_bf16)
    assert out_bf16.shape == (B, T, F * C)
    assert jnp.allclose(out_bf16.astype(jnp.float32), ref, atol=2e-2, rtol=2e-2), \
        "mismatch vs reference (bf16)"

    print("KERNEL_OK")
</pallas_src>

<mosaic_0001>
module attributes {stable_mosaic.version = 11 : i64} {
  func.func @_sine_act_kernel(%arg0: i32, %arg1: memref<16x5xf32, #tpu.memory_space<vmem>>, %arg2: memref<5x128xf32, #tpu.memory_space<vmem>>, %arg3: memref<16x128xf32, #tpu.memory_space<vmem>>) attributes {dimension_semantics = [#tpu.dimension_semantics<parallel>], iteration_bounds = array<i64: 1>, scalar_prefetch = 0 : i64, scratch_operands = 0 : i64, tpu.core_type = #tpu.core_type<tc>, window_params = [{transform_indices = @transform_0, window_bounds = array<i64: 16, 5>}, {pipeline_mode = #tpu.pipeline_mode<synchronous>, transform_indices = @transform_1, window_bounds = array<i64: 5, 128>}, {transform_indices = @transform_2, window_bounds = array<i64: 16, 128>}]} {
    %c0 = arith.constant 0 : index
    %c0_0 = arith.constant 0 : index
    %0 = vector.load %arg1[%c0, %c0_0] : memref<16x5xf32, #tpu.memory_space<vmem>>, vector<16x5xf32>
    %c0_1 = arith.constant 0 : index
    %c0_2 = arith.constant 0 : index
    %1 = vector.load %arg2[%c0_1, %c0_2] : memref<5x128xf32, #tpu.memory_space<vmem>>, vector<5x128xf32>
    %cst = arith.constant dense<0.000000e+00> : vector<16x128xf32>
    %2 = tpu.matmul %0, %1, %cst {dimension_numbers = #tpu.dot_dimension_numbers<[1], [0], [0], [1], [0, 0, 1, 1], [], []>} : vector<16x5xf32>, vector<5x128xf32>, vector<16x128xf32> -> vector<16x128xf32>
    %3 = tpu.iota {dimensions = array<i32: 1>} : vector<1x128xi32>
    %c32_i32 = arith.constant 32 : i32
    %c0_i32 = arith.constant 0 : i32
    %4 = arith.cmpi eq, %c32_i32, %c0_i32 : i32
    %c1_i32 = arith.constant 1 : i32
    %5 = arith.select %4, %c1_i32, %c32_i32 : i32
    %6 = vector.broadcast %5 : i32 to vector<1x128xi32>
    %7 = arith.remsi %3, %6 : vector<1x128xi32>
    %c0_i32_3 = arith.constant 0 : i32
    %8 = vector.broadcast %c0_i32_3 : i32 to vector<1x128xi32>
    %9 = arith.cmpi ne, %7, %8 : vector<1x128xi32>
    %c0_i32_4 = arith.constant 0 : i32
    %10 = vector.broadcast %c0_i32_4 : i32 to vector<1x128xi32>
    %11 = arith.cmpi slt, %7, %10 : vector<1x128xi32>
    %c0_i32_5 = arith.constant 0 : i32
    %12 = arith.cmpi slt, %5, %c0_i32_5 : i32
    %13 = vector.broadcast %12 : i1 to vector<1x128xi1>
    %14 = vector.broadcast %13 : vector<1x128xi1> to vector<1x128xi1>
    %15 = arith.xori %11, %14 : vector<1x128xi1>
    %16 = arith.andi %15, %9 : vector<1x128xi1>
    %17 = vector.broadcast %5 : i32 to vector<1x128xi32>
    %18 = arith.addi %7, %17 : vector<1x128xi32>
    %19 = arith.select %16, %18, %7 : vector<1x128xi1>, vector<1x128xi32>
    %c31_i32 = arith.constant 31 : i32
    %20 = vector.broadcast %c31_i32 : i32 to vector<1x128xi32>
    %21 = arith.cmpi slt, %19, %20 : vector<1x128xi32>
    %22 = math.sin %2 : vector<16x128xf32>
    %23 = vector.shape_cast %21 : vector<1x128xi1> to vector<1x128xi1>
    %24 = vector.broadcast %23 : vector<1x128xi1> to vector<16x128xi1>
    %25 = arith.select %24, %22, %2 : vector<16x128xi1>, vector<16x128xf32>
    %c0_6 = arith.constant 0 : index
    %c0_7 = arith.constant 0 : index
    %26 = vector.load %arg3[%c0_6, %c0_7] : memref<16x128xf32, #tpu.memory_space<vmem>>, vector<16x128xf32>
    tpu.vector_store %arg3[%c0_6, %c0_7], %25 {strides = array<i32>} : memref<16x128xf32, #tpu.memory_space<vmem>>, vector<16x128xf32>,
    return
  }
  func.func @transform_0(%arg0: i32) -> (i32, i32) {
    %c0_i32 = arith.constant 0 : i32
    %c0_i32_0 = arith.constant 0 : i32
    return %arg0, %c0_i32 : i32, i32
  }
  func.func @transform_1(%arg0: i32) -> (i32, i32) {
    %c0_i32 = arith.constant 0 : i32
    %c0_i32_0 = arith.constant 0 : i32
    %c0_i32_1 = arith.constant 0 : i32
    return %c0_i32, %c0_i32_0 : i32, i32
  }
  func.func @transform_2(%arg0: i32) -> (i32, i32) {
    %c0_i32 = arith.constant 0 : i32
    %c0_i32_0 = arith.constant 0 : i32
    return %arg0, %c0_i32 : i32, i32
  }
}

</mosaic_0001>

<llo_original>
// kernel: tpu_custom_call.1
$region0: #{tpu_custom_call.1}
  #allocation0 [shape = 'u32[]', space=smem, size = 0x4, offset = 0x4, fixed_abs, tag = 'smem constant byte address 0x4 - core index']
  #allocation1 [shape = 'u32[72,128]{1,0:T(1,128)}', space=vmem, size = 0x9000, scoped, tag = 'internal scratch']
  %s0 = inlined_call_operand.vmem [shape: f32[16,5], index: 0, kind: input, shape index: {}]
  %s1 = inlined_call_operand.vmem [shape: f32[5,128], index: 1, kind: input, shape index: {}]
  %s2 = inlined_call_operand.hbm [shape: f32[16,128], index: 2, kind: output, shape index: {}]
  %s3 = sld [smem:[#allocation0]]
  $region18: #{tpu_custom_call.1} parent=0
    _
  %s5 = ssub.s32 1, %s3
  %s6 = scalar_select 0, %s5, %s3
  $region1: #{tpu_custom_call.1} parent=0
    #allocation2 [shape = 'u8[8192]{0}', space=vmem, size = 0x2000, scoped, tag = 'output window, operand 0, single buffered']
    #allocation3 [shape = 's32[1]{0}', space=sflag, size = 0x4, scoped, tag = 'scoped memory for tpu_custom_call.1']
    %7 = vsyncpa [#allocation3], 0
    // Predicated region
    $region2: #{tpu_custom_call.1} parent=1 // pred_check
      _
    $region3: #{tpu_custom_call.1} parent=1 // pred_check_branch
      %9 = sbr.rel (0) target = $region5
    $region4: #{tpu_custom_call.1} parent=1 // pred_region
      _
    $region5: #{tpu_custom_call.1} parent=1 // pred_fallthru
      _
    // Predicated region
    $region6: #{tpu_custom_call.1} parent=1 // pred_check
      _
    $region7: #{tpu_custom_call.1} parent=1 // pred_check_branch
      %11 = sbr.rel (0) target = $region9
    $region8: #{tpu_custom_call.1} parent=1 // pred_region
      _
    $region9: #{tpu_custom_call.1} parent=1 // pred_fallthru
      _
    %v12 = vld [vmem:[%s0] sm:$0xff]
    %v13 = vld [vmem:[%s0 + $0x8] sm:$0xff]
    %v14 = vld [vmem:[%s1] sm:$0x1f]
    %vm15 = vcmask 39936
    %v17 = vsel %vm15, %v12, 0
    %v20 = vsel %vm15, %v13, 0
    %vm22 = vcmask 1044480
    %v24 = vsel %vm22, %v14, 0
    %26 = vmatpush.msra.mxu0 0.0
    %27 = vmatpush.msra.mxu0 0.0
    %28 = vmatpush.msra.mxu0 0.0
    %29 = vmatpush.msra.mxu0 0.0
    %30 = vmatpush.msra.mxu0 0.0
    %31 = vmatpush.msra.mxu0 0.0
    %32 = vmatpush.msra.mxu0 0.0
    %33 = vmatpush.msra.mxu0 0.0
    %34 = vmatpush.msra.mxu0 0.0
    %35 = vmatpush.msra.mxu0 0.0
    %36 = vmatpush.msra.mxu0 0.0
    %37 = vmatpush.msra.mxu0 0.0
    %38 = vmatpush.msra.mxu0 0.0
    %39 = vmatpush.msra.mxu0 0.0
    %40 = vmatpush.msra.mxu0 0.0
    %41 = vmatpush.msra.mxu0 %v24
    %42 = vmatmul.f32.gmra.mxu0 %v17
    %v43 = vpop.f32.mrf.mxu0
    %v44 = vadd.f32 0.0, %v43
    %45 = vmatmul.f32.gmra.mxu0 %v20
    %v46 = vpop.f32.mrf.mxu0
    %v47 = vadd.f32 0.0, %v46
    %48 = vdwg.mxu0
    %v49 = vlaneseq
    %v50 = vand.u32 %v49, 127
    %vm51 = vcmp.lt.s32.totalorder %v50, 0
    %v52 = vsub.s32 0, %v50
    %v53 = vsel %vm51, %v52, %v50
    %v54 = vshrl.u32 %v53, 5
    %v55 = vand.u32 %v53, 31
    %v56 = vsub.s32 0, %v55
    %v57 = vsel %vm51, %v56, %v55
    %vm58 = vcmp.ne.s32.totalorder %v57, 0
    %vm59 = vcmp.lt.s32.totalorder %v57, 0
    %vm60 = vmand %vm59, %vm58
    %v61 = vadd.s32 %v57, 32
    %v62 = vsel %vm60, %v61, %v57
    %vm63 = vcmp.lt.s32.totalorder %v62, 31
    %v64 = vand.u32 2147483647, %v44
    %vm65 = vcmp.le.f32.partialorder %v64, 0.7853982
    %vm66 = vcmp.lt.s32.totalorder %v44, 0
    %v67 = vand.u32 %v44, 2139095040
    %v68 = vshrl.u32 %v67, 23
    %v69 = vsub.s32 %v68, 127
    %v70 = vand.u32 2147483647, %v44
    %v71 = vand.u32 %v70, 8388607
    %v72 = vor.u32 %v71, 8388608
    %v73 = vsub.s32 0, %v72
    %v74 = vadd.s32 %v69, 1
    %vm75 = vcmp.gt.s32.totalorder %v74, 0
    %v76 = vsel %vm75, %v74, 0
    %v77 = vshrl.u32 %v76, 5
    %v78 = vand.u32 %v76, 31
    %v79 = vsub.s32 32, %v78
    %v80 = vshrl.u32 683565275, %v79
    %v81 = vshll.u32 683565275, %v78
    %v82 = vshrl.u32 2475754826, %v79
    %v83 = vor.u32 %v81, %v82
    %v84 = vshll.u32 2475754826, %v78
    %v85 = vshrl.u32 2131351028, %v79
    %v86 = vor.u32 %v84, %v85
    %v87 = vshll.u32 2131351028, %v78
    %v88 = vshrl.u32 2102212464, %v79
    %v89 = vor.u32 %v87, %v88
    %v90 = vshll.u32 2102212464, %v78
    %v91 = vshrl.u32 920167782, %v79
    %v92 = vor.u32 %v90, %v91
    %v93 = vshll.u32 920167782, %v78
    %v94 = vshrl.u32 1326507024, %v79
    %v95 = vor.u32 %v93, %v94
    %vm96 = vcmp.lt.s32.totalorder %v77, 1
    %vm97 = vcmp.lt.s32.totalorder %v77, 2
    %vm98 = vcmp.lt.s32.totalorder %v77, 3
    %vm99 = vcmp.lt.s32.totalorder %v77, 4
    %v100 = vsel %vm96, %v80, %v83
    %v101 = vsel %vm99, %v89, 2102212464
    %v102 = vsel %vm98, %v86, %v101
    %v103 = vsel %vm97, %v100, %v102
    %v104 = vsel %vm96, %v83, %v86
    %v105 = vsel %vm99, %v92, 920167782
    %v106 = vsel %vm98, %v89, %v105
    %v107 = vsel %vm97, %v104, %v106
    %v108 = vsel %vm96, %v86, %v89
    %v109 = vsel %vm99, %v95, 1326507024
    %v110 = vsel %vm98, %v92, %v109
    %v111 = vsel %vm97, %v108, %v110
    %v112 = vshll.u32 %v72, 8
    %v113 = vand.u32 %v112, 65535
    %v114 = vshrl.u32 %v112, 16
    %v115 = vand.u32 %v111, 65535
    %v116 = vshrl.u32 %v111, 16
    %v117 = vmul.u32 %v113, %v115
    %v118 = vmul.u32 %v113, %v116
    %v119 = vmul.u32 %v114, %v115
    %v120 = vmul.u32 %v114, %v116
    %v121 = vshll.u32 %v118, 16
    %v122 = vshrl.u32 %v118, 16
    %v123 = vshll.u32 %v119, 16
    %v124 = vshrl.u32 %v119, 16
    %vm125 = vc.u32 %v117, %v121
    %v126 = vsel %vm125, 1, 0
    %v127 = vadd.s32 %v117, %v121
    %v128 = vadd.s32 %v120, %v126
    %vm129 = vc.u32 %v127, %v123
    %v130 = vsel %vm129, 1, 0
    %v131 = vadd.s32 %v127, %v123
    %v132 = vadd.s32 %v128, %v130
    %v133 = vadd.s32 %v132, %v122
    %v134 = vadd.s32 %v133, %v124
    %v135 = vand.u32 %v112, 65535
    %v136 = vshrl.u32 %v112, 16
    %v137 = vand.u32 %v107, 65535
    %v138 = vshrl.u32 %v107, 16
    %v139 = vmul.u32 %v135, %v137
    %v140 = vmul.u32 %v135, %v138
    %v141 = vmul.u32 %v136, %v137
    %v142 = vmul.u32 %v136, %v138
    %v143 = vshll.u32 %v140, 16
    %v144 = vshrl.u32 %v140, 16
    %v145 = vshll.u32 %v141, 16
    %v146 = vshrl.u32 %v141, 16
    %vm147 = vc.u32 %v139, %v143
    %v148 = vsel %vm147, 1, 0
    %v149 = vadd.s32 %v139, %v143
    %v150 = vadd.s32 %v142, %v148
    %vm151 = vc.u32 %v149, %v145
    %v152 = vsel %vm151, 1, 0
    %v153 = vadd.s32 %v149, %v145
    %v154 = vadd.s32 %v150, %v152
    %v155 = vadd.s32 %v154, %v144
    %v156 = vadd.s32 %v155, %v146
    %v157 = vmul.u32 %v112, %v103
    %v158 = vadd.s32 %v134, %v153
    %vm159 = vc.u32 %v134, %v153
    %v160 = vadd.s32 %v156, 1
    %v161 = vsel %vm159, %v160, %v156
    %v162 = vadd.s32 %v157, %v161
    %v163 = vadd.s32 %v162, 536870912
    %v164 = vshrl.u32 %v163, 30
    %v165 = vshll.u32 %v164, 30
    %v166 = vsub.s32 %v162, %v165
    %vm167 = vcmp.lt.s32.totalorder %v166, 0
    %v168 = vsub.s32 0, %v166
    %v169 = vsel %vm167, %v168, %v166
    %v170 = vclz %v169
    %v171 = vsub.s32 %v170, 2
    %vm172 = vcmp.gt.s32.totalorder 0, %v171
    %v173 = vsel %vm172, 0, %v171
    %v174 = vsub.s32 32, %v173
    %v175 = vshll.u32 %v166, %v173
    %v176 = vshrl.u32 %v158, %v174
    %v177 = vor.u32 %v175, %v176
    %v178 = vsub.s32 4294967266, %v173
    %v179 = vadd.s32 %v178, 127
    %v180 = vshll.u32 %v179, 23
    %v181 = vor.u32 4788187, %v180
    %v182 = vand.u32 2147483647, %v181
    %v184 = vcvt.s32.f32 %v177
    %v185 = vmul.f32 %v184, %v182
    %v186 = vxor.u32 %v185, 2147483648
    %v187 = vsel %vm66, %v186, %v185
    %v188 = vsub.s32 4, %v164
    %v189 = vsel %vm66, %v188, %v164
    %v190 = vsel %vm65, %v44, %v187
    %v191 = vsel %vm65, 0, %v189
    %v192 = vmul.f32 %v190, %v190
    %v193 = vmul.f32 %v192, -0.001358992
    %v194 = vadd.f32 %v193, 0.041655596
    %v195 = vmul.f32 %v192, %v194
    %v196 = vadd.f32 %v195, -0.4999988
    %v197 = vmul.f32 %v192, %v196
    %v198 = vadd.f32 1.0, %v197
    %v199 = vmul.f32 %v190, %v190
    %v200 = vmul.f32 %v199, -0.00019511016
    %v201 = vadd.f32 %v200, 0.008332121
    %v202 = vmul.f32 %v199, %v201
    %v203 = vadd.f32 %v202, -0.16666654
    %v204 = vmul.f32 %v199, %v203
    %v205 = vadd.f32 %v204, 1.0
    %v206 = vmul.f32 %v205, %v190
    %vm207 = vweird.f32 %v44
    %v208 = vadd.s32 %v191, 3
    %v209 = vand.u32 %v208, 3
    %vm210 = vcmp.lt.s32.totalorder %v209, 2
    %vm211 = vcmp.eq.s32.totalorder %v209, 0
    %v212 = vxor.u32 %v206, 2147483648
    %v213 = vsel %vm211, %v198, %v212
    %vm214 = vcmp.eq.s32.totalorder %v209, 2
    %v215 = vxor.u32 %v198, 2147483648
    %v216 = vsel %vm214, %v215, %v206
    %v217 = vsel %vm210, %v213, %v216
    %v218 = vsel %vm207, nan, %v217
    %v219 = vand.u32 2147483647, %v47
    %vm220 = vcmp.le.f32.partialorder %v219, 0.7853982
    %vm221 = vcmp.lt.s32.totalorder %v47, 0
    %v222 = vand.u32 %v47, 2139095040
    %v223 = vshrl.u32 %v222, 23
    %v224 = vsub.s32 %v223, 127
    %v225 = vand.u32 2147483647, %v47
    %v226 = vand.u32 %v225, 8388607
    %v227 = vor.u32 %v226, 8388608
    %v228 = vsub.s32 0, %v227
    %v229 = vadd.s32 %v224, 1
    %vm230 = vcmp.gt.s32.totalorder %v229, 0
    %v231 = vsel %vm230, %v229, 0
    %v232 = vshrl.u32 %v231, 5
    %v233 = vand.u32 %v231, 31
    %v234 = vsub.s32 32, %v233
    %v235 = vshrl.u32 683565275, %v234
    %v236 = vshll.u32 683565275, %v233
    %v237 = vshrl.u32 2475754826, %v234
    %v238 = vor.u32 %v236, %v237
    %v239 = vshll.u32 2475754826, %v233
    %v240 = vshrl.u32 2131351028, %v234
    %v241 = vor.u32 %v239, %v240
    %v242 = vshll.u32 2131351028, %v233
    %v243 = vshrl.u32 2102212464, %v234
    %v244 = vor.u32 %v242, %v243
    %v245 = vshll.u32 2102212464, %v233
    %v246 = vshrl.u32 920167782, %v234
    %v247 = vor.u32 %v245, %v246
    %v248 = vshll.u32 920167782, %v233
    %v249 = vshrl.u32 1326507024, %v234
    %v250 = vor.u32 %v248, %v249
    %vm251 = vcmp.lt.s32.totalorder %v232, 1
    %vm252 = vcmp.lt.s32.totalorder %v232, 2
    %vm253 = vcmp.lt.s32.totalorder %v232, 3
    %vm254 = vcmp.lt.s32.totalorder %v232, 4
    %v255 = vsel %vm251, %v235, %v238
    %v256 = vsel %vm254, %v244, 2102212464
    %v257 = vsel %vm253, %v241, %v256
    %v258 = vsel %vm252, %v255, %v257
    %v259 = vsel %vm251, %v238, %v241
    %v260 = vsel %vm254, %v247, 920167782
    %v261 = vsel %vm253, %v244, %v260
    %v262 = vsel %vm252, %v259, %v261
    %v263 = vsel %vm251, %v241, %v244
    %v264 = vsel %vm254, %v250, 1326507024
    %v265 = vsel %vm253, %v247, %v264
    %v266 = vsel %vm252, %v263, %v265
    %v267 = vshll.u32 %v227, 8
    %v268 = vand.u32 %v267, 65535
    %v269 = vshrl.u32 %v267, 16
    %v270 = vand.u32 %v266, 65535
    %v271 = vshrl.u32 %v266, 16
    %v272 = vmul.u32 %v268, %v270
    %v273 = vmul.u32 %v268, %v271
    %v274 = vmul.u32 %v269, %v270
    %v275 = vmul.u32 %v269, %v271
    %v276 = vshll.u32 %v273, 16
    %v277 = vshrl.u32 %v273, 16
    %v278 = vshll.u32 %v274, 16
    %v279 = vshrl.u32 %v274, 16
    %vm280 = vc.u32 %v272, %v276
    %v281 = vsel %vm280, 1, 0
    %v282 = vadd.s32 %v272, %v276
    %v283 = vadd.s32 %v275, %v281
    %vm284 = vc.u32 %v282, %v278
    %v285 = vsel %vm284, 1, 0
    %v286 = vadd.s32 %v282, %v278
    %v287 = vadd.s32 %v283, %v285
    %v288 = vadd.s32 %v287, %v277
    %v289 = vadd.s32 %v288, %v279
    %v290 = vand.u32 %v267, 65535
    %v291 = vshrl.u32 %v267, 16
    %v292 = vand.u32 %v262, 65535
    %v293 = vshrl.u32 %v262, 16
    %v294 = vmul.u32 %v290, %v292
    %v295 = vmul.u32 %v290, %v293
    %v296 = vmul.u32 %v291, %v292
    %v297 = vmul.u32 %v291, %v293
    %v298 = vshll.u32 %v295, 16
    %v299 = vshrl.u32 %v295, 16
    %v300 = vshll.u32 %v296, 16
    %v301 = vshrl.u32 %v296, 16
    %vm302 = vc.u32 %v294, %v298
    %v303 = vsel %vm302, 1, 0
    %v304 = vadd.s32 %v294, %v298
    %v305 = vadd.s32 %v297, %v303
    %vm306 = vc.u32 %v304, %v300
    %v307 = vsel %vm306, 1, 0
    %v308 = vadd.s32 %v304, %v300
    %v309 = vadd.s32 %v305, %v307
    %v310 = vadd.s32 %v309, %v299
    %v311 = vadd.s32 %v310, %v301
    %v312 = vmul.u32 %v267, %v258
    %v313 = vadd.s32 %v289, %v308
    %vm314 = vc.u32 %v289, %v308
    %v315 = vadd.s32 %v311, 1
    %v316 = vsel %vm314, %v315, %v311
    %v317 = vadd.s32 %v312, %v316
    %v318 = vadd.s32 %v317, 536870912
    %v319 = vshrl.u32 %v318, 30
    %v320 = vshll.u32 %v319, 30
    %v321 = vsub.s32 %v317, %v320
    %vm322 = vcmp.lt.s32.totalorder %v321, 0
    %v323 = vsub.s32 0, %v321
    %v324 = vsel %vm322, %v323, %v321
    %v325 = vclz %v324
    %v326 = vsub.s32 %v325, 2
    %vm327 = vcmp.gt.s32.totalorder 0, %v326
    %v328 = vsel %vm327, 0, %v326
    %v329 = vsub.s32 32, %v328
    %v330 = vshll.u32 %v321, %v328
    %v331 = vshrl.u32 %v313, %v329
    %v332 = vor.u32 %v330, %v331
    %v333 = vsub.s32 4294967266, %v328
    %v334 = vadd.s32 %v333, 127
    %v335 = vshll.u32 %v334, 23
    %v336 = vor.u32 4788187, %v335
    %v337 = vand.u32 2147483647, %v336
    %v339 = vcvt.s32.f32 %v332
    %v340 = vmul.f32 %v339, %v337
    %v341 = vxor.u32 %v340, 2147483648
    %v342 = vsel %vm221, %v341, %v340
    %v343 = vsub.s32 4, %v319
    %v344 = vsel %vm221, %v343, %v319
    %v345 = vsel %vm220, %v47, %v342
    %v346 = vsel %vm220, 0, %v344
    %v347 = vmul.f32 %v345, %v345
    %v348 = vmul.f32 %v347, -0.001358992
    %v349 = vadd.f32 %v348, 0.041655596
    %v350 = vmul.f32 %v347, %v349
    %v351 = vadd.f32 %v350, -0.4999988
    %v352 = vmul.f32 %v347, %v351
    %v353 = vadd.f32 1.0, %v352
    %v354 = vmul.f32 %v345, %v345
    %v355 = vmul.f32 %v354, -0.00019511016
    %v356 = vadd.f32 %v355, 0.008332121
    %v357 = vmul.f32 %v354, %v356
    %v358 = vadd.f32 %v357, -0.16666654
    %v359 = vmul.f32 %v354, %v358
    %v360 = vadd.f32 %v359, 1.0
    %v361 = vmul.f32 %v360, %v345
    %vm362 = vweird.f32 %v47
    %v363 = vadd.s32 %v346, 3
    %v364 = vand.u32 %v363, 3
    %vm365 = vcmp.lt.s32.totalorder %v364, 2
    %vm366 = vcmp.eq.s32.totalorder %v364, 0
    %v367 = vxor.u32 %v361, 2147483648
    %v368 = vsel %vm366, %v353, %v367
    %vm369 = vcmp.eq.s32.totalorder %v364, 2
    %v370 = vxor.u32 %v353, 2147483648
    %v371 = vsel %vm369, %v370, %v361
    %v372 = vsel %vm365, %v368, %v371
    %v373 = vsel %vm362, nan, %v372
    %v374 = vsel %vm63, 1, 0
    %vm375 = vcmp.eq.s32.totalorder %v374, 1
    %v376 = vsel %vm375, %v218, %v44
    %v377 = vsel %vm375, %v373, %v47
    %378 = vst [vmem:[#allocation2] sm:$0xff] %v376
    %379 = vst [vmem:[#allocation2 + $0x8] sm:$0xff] %v377
    // Predicated region
    $region10: #{tpu_custom_call.1} parent=1 // pred_check
      _
    $region11: #{tpu_custom_call.1} parent=1 // pred_check_branch
      %381 = sbr.rel (0) target = $region13
    $region12: #{tpu_custom_call.1} parent=1 // pred_region
      %383 = vsyncadd [#allocation3], 0
      %s384 = sshll.u32 [#allocation2], 4
      %s385 = int_to_ptr.vmem [resolvable:$true] %s384
      %s386 = sshll.u32 %s2, 4
      %s387 = int_to_ptr.hbm [resolvable:$true] %s386
      %392 = dma.vmem_to_hbm [thread:$0]  %s385, 256, %s387, [#allocation3], 128, 128, 8
    $region13: #{tpu_custom_call.1} parent=1 // pred_fallthru
      _
    // Predicated region
    $region14: #{tpu_custom_call.1} parent=1 // pred_check
      _
    $region15: #{tpu_custom_call.1} parent=1 // pred_check_branch
      %394 = sbr.rel (0) target = $region17
    $region16: #{tpu_custom_call.1} parent=1 // pred_region
      %396 = dma.done [#allocation3], 256
    $region17: #{tpu_custom_call.1} parent=1 // pred_fallthru
      _
    %397 = vsyncpa [#allocation3], 1

</llo_original>
